<compile_context>
chip_gen: v7x
topology: tpu7x:2x2x1
jax: 0.10.0
libtpu: 0.0.40
codegen_flags: <defaults>
</compile_context>

<pallas_src>
import jax
import jax.numpy as jnp
from jax.experimental import pallas as pl
from jax.experimental.pallas import tpu as pltpu


def se_kernel(x_ref, w1t_ref, b1_ref, w2t_ref, b2_ref, o_ref):
    # x_ref block: (TB, C, HW) in the streaming dtype (f32 or bf16).
    inv_hw = jnp.float32(1.0 / x_ref.shape[-1])

    # Squeeze: global average pool over the spatial (lane) axis -> (TB, C).
    # Cast is fused into the reduce; no f32 copy of the whole slab is kept.
    s = jnp.sum(x_ref[...].astype(jnp.float32), axis=-1) * inv_hw

    # Excitation (always f32).  w1t = fc1.weight.T : (C, Cr),
    # w2t = fc2.weight.T : (Cr, C); weights/biases are VMEM-resident
    # (constant index maps) across all grid steps.
    h = jnp.dot(s, w1t_ref[...], preferred_element_type=jnp.float32) + b1_ref[...]
    h = jnp.maximum(h, 0.0)                                           # (TB, Cr)
    g = jnp.dot(h, w2t_ref[...], preferred_element_type=jnp.float32) + b2_ref[...]
    scale = jax.nn.sigmoid(g).astype(o_ref.dtype)                     # (TB, C)

    # Reweight channels in the streaming dtype and write back
    # (sublane value broadcast over the HW lanes).
    o_ref[...] = x_ref[...] * scale[:, :, None]


_TARGET_SLAB_BYTES = 2 * 1024 * 1024   # ~2 MiB activation slab per grid step
_MIN_GRID_STEPS = 8                     # keep the DMA/compute pipeline busy


def _pick_tb(B, C, HW, itemsize):
    """Batch tile sized for pipeline overlap, not maximal VMEM fill."""
    per_image = max(1, C * HW * itemsize)
    tb = max(1, _TARGET_SLAB_BYTES // per_image)
    if B >= _MIN_GRID_STEPS:
        tb = min(tb, max(1, B // _MIN_GRID_STEPS))
    return int(min(tb, B))


def se_block(x, w1, b1, w2, b2):
    """x: (B, C, H, W).  w1: (C//r, C), b1: (C//r,), w2: (C, C//r), b2: (C,)."""
    B, C, H, W = x.shape
    HW = H * W
    Cr = w1.shape[0]

    # Free, contiguous reshape: spatial dims fused onto the lane axis.
    x3 = x.reshape(B, C, HW)
    # Pre-transpose weights once so the kernel does (TB,C)@(C,Cr), (TB,Cr)@(Cr,C).
    w1t = w1.T                      # (C, Cr)
    w2t = w2.T                      # (Cr, C)
    b1r = b1.reshape(1, Cr)
    b2r = b2.reshape(1, C)

    itemsize = jnp.dtype(x.dtype).itemsize
    TB = _pick_tb(B, C, HW, itemsize)
    grid = (pl.cdiv(B, TB),)        # last block may be partial; writes are clipped

    out = pl.pallas_call(
        se_kernel,
        out_shape=jax.ShapeDtypeStruct((B, C, HW), x.dtype),
        grid=grid,
        in_specs=[
            pl.BlockSpec((TB, C, HW), lambda b: (b, 0, 0)),   # activation slab
            pl.BlockSpec((C, Cr), lambda b: (0, 0)),          # fc1 weight^T
            pl.BlockSpec((1, Cr), lambda b: (0, 0)),          # fc1 bias
            pl.BlockSpec((Cr, C), lambda b: (0, 0)),          # fc2 weight^T
            pl.BlockSpec((1, C), lambda b: (0, 0)),           # fc2 bias
        ],
        out_specs=pl.BlockSpec((TB, C, HW), lambda b: (b, 0, 0)),
        compiler_params=pltpu.CompilerParams(
            dimension_semantics=("parallel",),
            vmem_limit_bytes=32 * 1024 * 1024,
        ),
    )(x3, w1t, b1r, w2t, b2r)

    return out.reshape(B, C, H, W)


def se_block_ref(x, w1, b1, w2, b2):
    """Pure-JAX reference mirroring the PyTorch forward."""
    B, C, H, W = x.shape
    se = x.reshape(B, C, -1).mean(axis=2)            # (B, C)
    se = se @ w1.T + b1                              # (B, Cr)
    se = jnp.maximum(se, 0.0)
    se = se @ w2.T + b2                              # (B, C)
    se = jax.nn.sigmoid(se).reshape(B, C, 1, 1)
    return x * se


if __name__ == "__main__":
    # Small shapes consistent with the module (channels a multiple of reduction).
    B, C, H, W = 2, 32, 8, 8
    reduction = 16
    Cr = C // reduction

    key = jax.random.PRNGKey(0)
    kx, kw1, kb1, kw2, kb2 = jax.random.split(key, 5)

    x = jax.random.normal(kx, (B, C, H, W), dtype=jnp.float32)
    # Torch Linear weight shapes: (out_features, in_features).
    w1 = jax.random.normal(kw1, (Cr, C), dtype=jnp.float32) * 0.1
    b1 = jax.random.normal(kb1, (Cr,), dtype=jnp.float32) * 0.1
    w2 = jax.random.normal(kw2, (C, Cr), dtype=jnp.float32) * 0.1
    b2 = jax.random.normal(kb2, (C,), dtype=jnp.float32) * 0.1

    # f32 path: exact match against the reference.
    out = jax.block_until_ready(se_block(x, w1, b1, w2, b2))
    ref = se_block_ref(x, w1, b1, w2, b2)
    assert out.shape == (B, C, H, W)
    assert jnp.allclose(out, ref, atol=1e-5, rtol=1e-5), "f32 mismatch vs reference"

    # bf16 streaming path (the bandwidth-optimized mode): looser tolerance.
    xb = x.astype(jnp.bfloat16)
    out_b = jax.block_until_ready(se_block(xb, w1, b1, w2, b2))
    ref_b = se_block_ref(xb.astype(jnp.float32), w1, b1, w2, b2)
    assert out_b.dtype == jnp.bfloat16
    assert jnp.allclose(out_b.astype(jnp.float32), ref_b, atol=5e-2, rtol=5e-2), (
        "bf16 mismatch vs reference")

    print("KERNEL_OK")
</pallas_src>

<mosaic_0001>
module attributes {stable_mosaic.version = 11 : i64} {
  func.func @se_kernel(%arg0: i32, %arg1: memref<2x32x64xf32, #tpu.memory_space<vmem>>, %arg2: memref<32x2xf32, #tpu.memory_space<vmem>>, %arg3: memref<1x2xf32, #tpu.memory_space<vmem>>, %arg4: memref<2x32xf32, #tpu.memory_space<vmem>>, %arg5: memref<1x32xf32, #tpu.memory_space<vmem>>, %arg6: memref<2x32x64xf32, #tpu.memory_space<vmem>>) attributes {dimension_semantics = [#tpu.dimension_semantics<parallel>], iteration_bounds = array<i64: 1>, scalar_prefetch = 0 : i64, scratch_operands = 0 : i64, tpu.core_type = #tpu.core_type<tc>, window_params = [{transform_indices = @transform_0, window_bounds = array<i64: 2, 32, 64>}, {pipeline_mode = #tpu.pipeline_mode<synchronous>, transform_indices = @transform_1, window_bounds = array<i64: 32, 2>}, {pipeline_mode = #tpu.pipeline_mode<synchronous>, transform_indices = @transform_2, window_bounds = array<i64: 1, 2>}, {pipeline_mode = #tpu.pipeline_mode<synchronous>, transform_indices = @transform_3, window_bounds = array<i64: 2, 32>}, {pipeline_mode = #tpu.pipeline_mode<synchronous>, transform_indices = @transform_4, window_bounds = array<i64: 1, 32>}, {transform_indices = @transform_5, window_bounds = array<i64: 2, 32, 64>}]} {
    %c0 = arith.constant 0 : index
    %c0_0 = arith.constant 0 : index
    %c0_1 = arith.constant 0 : index
    %0 = vector.load %arg1[%c0, %c0_0, %c0_1] : memref<2x32x64xf32, #tpu.memory_space<vmem>>, vector<2x32x64xf32>
    %cst = arith.constant dense<0.000000e+00> : vector<2x32xf32>
    %1 = vector.multi_reduction <add>, %0, %cst [2] : vector<2x32x64xf32> to vector<2x32xf32>
    %cst_2 = arith.constant 1.562500e-02 : f32
    %2 = vector.broadcast %cst_2 : f32 to vector<2x32xf32>
    %3 = arith.mulf %1, %2 : vector<2x32xf32>
    %c0_3 = arith.constant 0 : index
    %c0_4 = arith.constant 0 : index
    %4 = vector.load %arg2[%c0_3, %c0_4] : memref<32x2xf32, #tpu.memory_space<vmem>>, vector<32x2xf32>
    %cst_5 = arith.constant dense<0.000000e+00> : vector<2x2xf32>
    %5 = tpu.matmul %3, %4, %cst_5 {dimension_numbers = #tpu.dot_dimension_numbers<[1], [0], [0], [1], [0, 0, 1, 1], [], []>} : vector<2x32xf32>, vector<32x2xf32>, vector<2x2xf32> -> vector<2x2xf32>
    %c0_6 = arith.constant 0 : index
    %c0_7 = arith.constant 0 : index
    %6 = vector.load %arg3[%c0_6, %c0_7] : memref<1x2xf32, #tpu.memory_space<vmem>>, vector<1x2xf32>
    %7 = vector.broadcast %6 : vector<1x2xf32> to vector<2x2xf32>
    %8 = arith.addf %5, %7 : vector<2x2xf32>
    %cst_8 = arith.constant 0.000000e+00 : f32
    %9 = vector.broadcast %cst_8 : f32 to vector<2x2xf32>
    %10 = arith.maximumf %8, %9 : vector<2x2xf32>
    %c0_9 = arith.constant 0 : index
    %c0_10 = arith.constant 0 : index
    %11 = vector.load %arg4[%c0_9, %c0_10] : memref<2x32xf32, #tpu.memory_space<vmem>>, vector<2x32xf32>
    %cst_11 = arith.constant dense<0.000000e+00> : vector<2x32xf32>
    %12 = tpu.matmul %10, %11, %cst_11 {dimension_numbers = #tpu.dot_dimension_numbers<[1], [0], [0], [1], [0, 0, 1, 1], [], []>} : vector<2x2xf32>, vector<2x32xf32>, vector<2x32xf32> -> vector<2x32xf32>
    %c0_12 = arith.constant 0 : index
    %c0_13 = arith.constant 0 : index
    %13 = vector.load %arg5[%c0_12, %c0_13] : memref<1x32xf32, #tpu.memory_space<vmem>>, vector<1x32xf32>
    %14 = vector.broadcast %13 : vector<1x32xf32> to vector<2x32xf32>
    %15 = arith.addf %12, %14 : vector<2x32xf32>
    %16 = arith.negf %15 : vector<2x32xf32>
    %17 = math.exp %16 : vector<2x32xf32>
    %cst_14 = arith.constant 1.000000e+00 : f32
    %18 = vector.broadcast %cst_14 : f32 to vector<2x32xf32>
    %19 = arith.addf %18, %17 : vector<2x32xf32>
    %20 = arith.divf %18, %19 : vector<2x32xf32>
    %c0_15 = arith.constant 0 : index
    %c0_16 = arith.constant 0 : index
    %c0_17 = arith.constant 0 : index
    %21 = vector.load %arg1[%c0_15, %c0_16, %c0_17] : memref<2x32x64xf32, #tpu.memory_space<vmem>>, vector<2x32x64xf32>
    %22 = vector.shape_cast %20 : vector<2x32xf32> to vector<2x32x1xf32>
    %23 = vector.broadcast %22 : vector<2x32x1xf32> to vector<2x32x64xf32>
    %24 = arith.mulf %21, %23 : vector<2x32x64xf32>
    %c0_18 = arith.constant 0 : index
    %c0_19 = arith.constant 0 : index
    %c0_20 = arith.constant 0 : index
    %25 = vector.load %arg6[%c0_18, %c0_19, %c0_20] : memref<2x32x64xf32, #tpu.memory_space<vmem>>, vector<2x32x64xf32>
    tpu.vector_store %arg6[%c0_18, %c0_19, %c0_20], %24 {strides = array<i32>} : memref<2x32x64xf32, #tpu.memory_space<vmem>>, vector<2x32x64xf32>,
    return
  }
  func.func @transform_0(%arg0: i32) -> (i32, i32, i32) {
    %c0_i32 = arith.constant 0 : i32
    %c0_i32_0 = arith.constant 0 : i32
    %c0_i32_1 = arith.constant 0 : i32
    return %arg0, %c0_i32, %c0_i32_0 : i32, i32, i32
  }
  func.func @transform_1(%arg0: i32) -> (i32, i32) {
    %c0_i32 = arith.constant 0 : i32
    %c0_i32_0 = arith.constant 0 : i32
    %c0_i32_1 = arith.constant 0 : i32
    return %c0_i32, %c0_i32_0 : i32, i32
  }
  func.func @transform_2(%arg0: i32) -> (i32, i32) {
    %c0_i32 = arith.constant 0 : i32
    %c0_i32_0 = arith.constant 0 : i32
    %c0_i32_1 = arith.constant 0 : i32
    return %c0_i32, %c0_i32_0 : i32, i32
  }
  func.func @transform_3(%arg0: i32) -> (i32, i32) {
    %c0_i32 = arith.constant 0 : i32
    %c0_i32_0 = arith.constant 0 : i32
    %c0_i32_1 = arith.constant 0 : i32
    return %c0_i32, %c0_i32_0 : i32, i32
  }
  func.func @transform_4(%arg0: i32) -> (i32, i32) {
    %c0_i32 = arith.constant 0 : i32
    %c0_i32_0 = arith.constant 0 : i32
    %c0_i32_1 = arith.constant 0 : i32
    return %c0_i32, %c0_i32_0 : i32, i32
  }
  func.func @transform_5(%arg0: i32) -> (i32, i32, i32) {
    %c0_i32 = arith.constant 0 : i32
    %c0_i32_0 = arith.constant 0 : i32
    %c0_i32_1 = arith.constant 0 : i32
    return %arg0, %c0_i32, %c0_i32_0 : i32, i32, i32
  }
}

</mosaic_0001>

<llo_original>
// kernel: tpu_custom_call.1
$region0: #{tpu_custom_call.1}
  #allocation0 [shape = 'u32[]', space=smem, size = 0x4, offset = 0x4, fixed_abs, tag = 'smem constant byte address 0x4 - core index']
  #allocation1 [shape = 'u32[144,128]{1,0:T(1,128)}', space=vmem, size = 0x12000, scoped, tag = 'internal scratch']
  %s0 = inlined_call_operand.hbm [shape: f32[2,32,64], index: 0, kind: input, shape index: {}]
  %s1 = inlined_call_operand.vmem [shape: f32[32,2], index: 1, kind: input, shape index: {}]
  %s2 = inlined_call_operand.vmem [shape: f32[1,2], index: 2, kind: input, shape index: {}]
  %s3 = inlined_call_operand.vmem [shape: f32[2,32], index: 3, kind: input, shape index: {}]
  %s4 = inlined_call_operand.vmem [shape: f32[1,32], index: 4, kind: input, shape index: {}]
  %s5 = inlined_call_operand.hbm [shape: f32[2,32,64], index: 5, kind: output, shape index: {}]
  %s6 = sld [smem:[#allocation0]]
  $region34: #{tpu_custom_call.1} parent=0
    _
  %s8 = ssub.s32 1, %s6
  %s9 = scalar_select 0, %s8, %s6
  $region1: #{tpu_custom_call.1} parent=0
    #allocation2 [shape = 'u8[32768]{0}', space=vmem, size = 0x8000, scoped, tag = 'input window, operand 0, single buffered']
    #allocation3 [shape = 's32[1]{0}', space=sflag, size = 0x4, scoped, tag = 'scoped memory for tpu_custom_call.1']
    #allocation4 [shape = 's32[1]{0}', space=sflag, size = 0x4, scoped, tag = 'scoped memory for tpu_custom_call.1']
    #allocation5 [shape = 'u8[32768]{0}', space=vmem, size = 0x8000, scoped, tag = 'output window, operand 0, single buffered']
    %10 = vsyncpa [#allocation3], 0
    %11 = vsyncpa [#allocation4], 0
    // Predicated region
    $region2: #{tpu_custom_call.1} parent=1 // pred_check
      _
    $region3: #{tpu_custom_call.1} parent=1 // pred_check_branch
      %13 = sbr.rel (0) target = $region5
    $region4: #{tpu_custom_call.1} parent=1 // pred_region
      %s15 = ssub.s32 1024, 1024
      %16 = vsyncadd [#allocation3], %s15
      %s17 = sshll.u32 [#allocation2], 4
      %s18 = int_to_ptr.vmem [resolvable:$true] %s17
      %23 = dma.hbm_to_vmem [thread:$0]  %s0, 1024, %s18, [#allocation3], 128, 128, 8
    $region5: #{tpu_custom_call.1} parent=1 // pred_fallthru
      _
    // Predicated region
    $region6: #{tpu_custom_call.1} parent=1 // pred_check
      _
    $region7: #{tpu_custom_call.1} parent=1 // pred_check_branch
      %25 = sbr.rel (0) target = $region9
    $region8: #{tpu_custom_call.1} parent=1 // pred_region
      _
    $region9: #{tpu_custom_call.1} parent=1 // pred_fallthru
      _
    // Predicated region
    $region10: #{tpu_custom_call.1} parent=1 // pred_check
      _
    $region11: #{tpu_custom_call.1} parent=1 // pred_check_branch
      %27 = sbr.rel (0) target = $region13
    $region12: #{tpu_custom_call.1} parent=1 // pred_region
      _
    $region13: #{tpu_custom_call.1} parent=1 // pred_fallthru
      _
    // Predicated region
    $region14: #{tpu_custom_call.1} parent=1 // pred_check
      _
    $region15: #{tpu_custom_call.1} parent=1 // pred_check_branch
      %29 = sbr.rel (0) target = $region17
    $region16: #{tpu_custom_call.1} parent=1 // pred_region
      _
    $region17: #{tpu_custom_call.1} parent=1 // pred_fallthru
      _
    // Predicated region
    $region18: #{tpu_custom_call.1} parent=1 // pred_check
      _
    $region19: #{tpu_custom_call.1} parent=1 // pred_check_branch
      %31 = sbr.rel (0) target = $region21
    $region20: #{tpu_custom_call.1} parent=1 // pred_region
      _
    $region21: #{tpu_custom_call.1} parent=1 // pred_fallthru
      _
    // Predicated region
    $region22: #{tpu_custom_call.1} parent=1 // pred_check
      _
    $region23: #{tpu_custom_call.1} parent=1 // pred_check_branch
      %33 = sbr.rel (0) target = $region25
    $region24: #{tpu_custom_call.1} parent=1 // pred_region
      %34 = dma.done [#allocation3], 1024
    $region25: #{tpu_custom_call.1} parent=1 // pred_fallthru
      _
    %v35 = vld [vmem:[#allocation2] sm:$0xff]
    %v36 = vld [vmem:[#allocation2 + $0x8] sm:$0xff]
    %v37 = vld [vmem:[#allocation2 + $0x10] sm:$0xff]
    %v38 = vld [vmem:[#allocation2 + $0x18] sm:$0xff]
    %v39 = vld [vmem:[#allocation2 + $0x20] sm:$0xff]
    %v40 = vld [vmem:[#allocation2 + $0x28] sm:$0xff]
    %v41 = vld [vmem:[#allocation2 + $0x30] sm:$0xff]
    %v42 = vld [vmem:[#allocation2 + $0x38] sm:$0xff]
    %vm43 = vcmask 523264
    %v44 = vsel %vm43, %v35, 0.0
    %45 = vadd.xlane.f32.xlu0 %v44
    %v46 = vpop.xlane.xlu0 %45
    %v47 = vsel %vm43, %v36, 0.0
    %48 = vadd.xlane.f32.xlu0 %v47
    %v49 = vpop.xlane.xlu0 %48
    %v50 = vsel %vm43, %v37, 0.0
    %51 = vadd.xlane.f32.xlu0 %v50
    %v52 = vpop.xlane.xlu0 %51
    %v53 = vsel %vm43, %v38, 0.0
    %54 = vadd.xlane.f32.xlu0 %v53
    %v55 = vpop.xlane.xlu0 %54
    %v56 = vsel %vm43, %v39, 0.0
    %57 = vadd.xlane.f32.xlu0 %v56
    %v58 = vpop.xlane.xlu0 %57
    %v59 = vsel %vm43, %v40, 0.0
    %60 = vadd.xlane.f32.xlu0 %v59
    %v61 = vpop.xlane.xlu0 %60
    %v62 = vsel %vm43, %v41, 0.0
    %63 = vadd.xlane.f32.xlu0 %v62
    %v64 = vpop.xlane.xlu0 %63
    %v65 = vsel %vm43, %v42, 0.0
    %66 = vadd.xlane.f32.xlu0 %v65
    %v67 = vpop.xlane.xlu0 %66
    %v68 = vmul.f32 %v46, 0.015625
    %v69 = vmul.f32 %v49, 0.015625
    %v70 = vmul.f32 %v52, 0.015625
    %v71 = vmul.f32 %v55, 0.015625
    %v72 = vmul.f32 %v58, 0.015625
    %v73 = vmul.f32 %v61, 0.015625
    %v74 = vmul.f32 %v64, 0.015625
    %v75 = vmul.f32 %v67, 0.015625
    %v76 = vld [vmem:[%s1] sm:$0xff]
    %v77 = vld [vmem:[%s1 + $0x8] sm:$0xff]
    %v78 = vld [vmem:[%s1 + $0x10] sm:$0xff]
    %v79 = vld [vmem:[%s1 + $0x18] sm:$0xff]
    %v80 = vld [vmem:[%s2] sm:$0x1]
    %v82 = vlaneseq
    %v83 = vshrl.u32 %v82, 7
    %v84 = vsub.s32 0, %v83
    %v85 = vrot.slane %v80, %v84
    %v95 = vlaneseq
    %v96 = vand.u32 %v95, 127
    %v97 = vlaneseq
    %v98 = vshrl.u32 %v97, 7
    %v99 = vsub.s32 %v96, %v98
    %v100 = vrot.slane %v68, %v99
    %v101 = vadd.s32 %v96, 4294967288
    %v102 = vlaneseq
    %v103 = vshrl.u32 %v102, 7
    %v104 = vsub.s32 %v101, %v103
    %v105 = vrot.slane %v69, %v104
    %vm106 = vcmask 130112
    %v107 = vsel %vm106, %v105, %v100
    %v108 = vadd.s32 %v96, 4294967280
    %v109 = vlaneseq
    %v110 = vshrl.u32 %v109, 7
    %v111 = vsub.s32 %v108, %v110
    %v112 = vrot.slane %v70, %v111
    %vm113 = vcmask 195712
    %v114 = vsel %vm113, %v112, %v107
    %v115 = vadd.s32 %v96, 4294967272
    %v116 = vlaneseq
    %v117 = vshrl.u32 %v116, 7
    %v118 = vsub.s32 %v115, %v117
    %v119 = vrot.slane %v71, %v118
    %vm120 = vcmask 261312
    %v121 = vsel %vm120, %v119, %v114
    %v122 = vlaneseq
    %v123 = vshrl.u32 %v122, 7
    %v124 = vsub.s32 %v96, %v123
    %v125 = vrot.slane %v72, %v124
    %v126 = vlaneseq
    %v127 = vshrl.u32 %v126, 7
    %v128 = vsub.s32 %v101, %v127
    %v129 = vrot.slane %v73, %v128
    %v130 = vsel %vm106, %v129, %v125
    %v131 = vlaneseq
    %v132 = vshrl.u32 %v131, 7
    %v133 = vsub.s32 %v108, %v132
    %v134 = vrot.slane %v74, %v133
    %v135 = vsel %vm113, %v134, %v130
    %v136 = vlaneseq
    %v137 = vshrl.u32 %v136, 7
    %v138 = vsub.s32 %v115, %v137
    %v139 = vrot.slane %v75, %v138
    %v140 = vsel %vm120, %v139, %v135
    %vm141 = vcmask 1041409
    %v142 = vsel %vm141, %v140, %v121
    %vm143 = vcmask 261120
    %v144 = vsel %vm143, %v142, 0
    %146 = vmatprep.subr.mxu0 0.0
    %147 = vmatpush1.msra.mxu0 %v76
    %148 = vmatprep.subr.mxu0 0.0
    %149 = vmatpush1.msra.mxu0 %v77
    %150 = vmatprep.subr.mxu0 0.0
    %151 = vmatpush1.msra.mxu0 %v78
    %152 = vmatprep.subr.mxu0 0.0
    %153 = vmatpush1.msra.mxu0 %v79
    %154 = vmatprep.subr.mxu0 0.0
    %155 = vmatpush1.msra.mxu0 0.0
    %156 = vmatprep.subr.mxu0 0.0
    %157 = vmatpush1.msra.mxu0 0.0
    %158 = vmatprep.subr.mxu0 0.0
    %159 = vmatpush1.msra.mxu0 0.0
    %160 = vmatprep.subr.mxu0 0.0
    %161 = vmatpush1.msra.mxu0 0.0
    %162 = vmatprep.subr.mxu0 0.0
    %163 = vmatpush1.msra.mxu0 0.0
    %164 = vmatprep.subr.mxu0 0.0
    %165 = vmatpush1.msra.mxu0 0.0
    %166 = vmatprep.subr.mxu0 0.0
    %167 = vmatpush1.msra.mxu0 0.0
    %168 = vmatprep.subr.mxu0 0.0
    %169 = vmatpush1.msra.mxu0 0.0
    %170 = vmatprep.subr.mxu0 0.0
    %171 = vmatpush1.msra.mxu0 0.0
    %172 = vmatprep.subr.mxu0 0.0
    %173 = vmatpush1.msra.mxu0 0.0
    %174 = vmatprep.subr.mxu0 0.0
    %175 = vmatpush1.msra.mxu0 0.0
    %176 = vmatprep.subr.mxu0 0.0
    %177 = vmatpush1.msra.mxu0 0.0
    %178 = vmatprep.subr.mxu0 0.0
    %179 = vmatpush1.msra.mxu0 0.0
    %180 = vmatprep.subr.mxu0 0.0
    %181 = vmatpush1.msra.mxu0 0.0
    %182 = vmatprep.subr.mxu0 0.0
    %183 = vmatpush1.msra.mxu0 0.0
    %184 = vmatprep.subr.mxu0 0.0
    %185 = vmatpush1.msra.mxu0 0.0
    %186 = vmatprep.subr.mxu0 0.0
    %187 = vmatpush1.msra.mxu0 0.0
    %188 = vmatprep.subr.mxu0 0.0
    %189 = vmatpush1.msra.mxu0 0.0
    %190 = vmatprep.subr.mxu0 0.0
    %191 = vmatpush1.msra.mxu0 0.0
    %192 = vmatprep.subr.mxu0 0.0
    %193 = vmatpush1.msra.mxu0 0.0
    %194 = vmatprep.subr.mxu0 0.0
    %195 = vmatpush1.msra.mxu0 0.0
    %196 = vmatprep.subr.mxu0 0.0
    %197 = vmatpush1.msra.mxu0 0.0
    %198 = vmatprep.subr.mxu0 0.0
    %199 = vmatpush1.msra.mxu0 0.0
    %200 = vmatprep.subr.mxu0 0.0
    %201 = vmatpush1.msra.mxu0 0.0
    %202 = vmatprep.subr.mxu0 0.0
    %203 = vmatpush1.msra.mxu0 0.0
    %204 = vmatprep.subr.mxu0 0.0
    %205 = vmatpush1.msra.mxu0 0.0
    %206 = vmatprep.subr.mxu0 0.0
    %207 = vmatpush1.msra.mxu0 0.0
    %208 = vmatprep.subr.mxu0 0.0
    %209 = vmatpush1.msra.mxu0 0.0
    %210 = vmatprep.mubr.f32.mxu0 0.0
    %211 = vmatmul.mubr.f32.gmra.mrb[0].mxu0 %v144
    %v212 = vpop.f32.mrb[0].mxu0
    %v213 = vadd.f32 %v85, %v212
    %v214 = vpop.f32.mrb[0].mxu0
    %215 = vdwg.mxu0
    %v216 = vmax.f32 %v213, 0.0
    %v217 = vld [vmem:[%s3] sm:$0x3]
    %v218 = vld [vmem:[%s4] sm:$0x1]
    %v220 = vlaneseq
    %v221 = vshrl.u32 %v220, 7
    %v222 = vsub.s32 0, %v221
    %v223 = vrot.slane %v218, %v222
    %vm225 = vcmask 15360
    %v227 = vsel %vm225, %v216, 0
    %vm229 = vcmask 1041408
    %v231 = vsel %vm229, %v217, 0
    %233 = vmatprep.subr.mxu0 0.0
    %234 = vmatpush1.msra.mxu0 %v231
    %235 = vmatprep.subr.mxu0 0.0
    %236 = vmatpush1.msra.mxu0 0.0
    %237 = vmatprep.subr.mxu0 0.0
    %238 = vmatpush1.msra.mxu0 0.0
    %239 = vmatprep.subr.mxu0 0.0
    %240 = vmatpush1.msra.mxu0 0.0
    %241 = vmatprep.subr.mxu0 0.0
    %242 = vmatpush1.msra.mxu0 0.0
    %243 = vmatprep.subr.mxu0 0.0
    %244 = vmatpush1.msra.mxu0 0.0
    %245 = vmatprep.subr.mxu0 0.0
    %246 = vmatpush1.msra.mxu0 0.0
    %247 = vmatprep.subr.mxu0 0.0
    %248 = vmatpush1.msra.mxu0 0.0
    %249 = vmatprep.subr.mxu0 0.0
    %250 = vmatpush1.msra.mxu0 0.0
    %251 = vmatprep.subr.mxu0 0.0
    %252 = vmatpush1.msra.mxu0 0.0
    %253 = vmatprep.subr.mxu0 0.0
    %254 = vmatpush1.msra.mxu0 0.0
    %255 = vmatprep.subr.mxu0 0.0
    %256 = vmatpush1.msra.mxu0 0.0
    %257 = vmatprep.subr.mxu0 0.0
    %258 = vmatpush1.msra.mxu0 0.0
    %259 = vmatprep.subr.mxu0 0.0
    %260 = vmatpush1.msra.mxu0 0.0
    %261 = vmatprep.subr.mxu0 0.0
    %262 = vmatpush1.msra.mxu0 0.0
    %263 = vmatprep.subr.mxu0 0.0
    %264 = vmatpush1.msra.mxu0 0.0
    %265 = vmatprep.subr.mxu0 0.0
    %266 = vmatpush1.msra.mxu0 0.0
    %267 = vmatprep.subr.mxu0 0.0
    %268 = vmatpush1.msra.mxu0 0.0
    %269 = vmatprep.subr.mxu0 0.0
    %270 = vmatpush1.msra.mxu0 0.0
    %271 = vmatprep.subr.mxu0 0.0
    %272 = vmatpush1.msra.mxu0 0.0
    %273 = vmatprep.subr.mxu0 0.0
    %274 = vmatpush1.msra.mxu0 0.0
    %275 = vmatprep.subr.mxu0 0.0
    %276 = vmatpush1.msra.mxu0 0.0
    %277 = vmatprep.subr.mxu0 0.0
    %278 = vmatpush1.msra.mxu0 0.0
    %279 = vmatprep.subr.mxu0 0.0
    %280 = vmatpush1.msra.mxu0 0.0
    %281 = vmatprep.subr.mxu0 0.0
    %282 = vmatpush1.msra.mxu0 0.0
    %283 = vmatprep.subr.mxu0 0.0
    %284 = vmatpush1.msra.mxu0 0.0
    %285 = vmatprep.subr.mxu0 0.0
    %286 = vmatpush1.msra.mxu0 0.0
    %287 = vmatprep.subr.mxu0 0.0
    %288 = vmatpush1.msra.mxu0 0.0
    %289 = vmatprep.subr.mxu0 0.0
    %290 = vmatpush1.msra.mxu0 0.0
    %291 = vmatprep.subr.mxu0 0.0
    %292 = vmatpush1.msra.mxu0 0.0
    %293 = vmatprep.subr.mxu0 0.0
    %294 = vmatpush1.msra.mxu0 0.0
    %295 = vmatprep.subr.mxu0 0.0
    %296 = vmatpush1.msra.mxu0 0.0
    %297 = vmatprep.mubr.f32.mxu0 0.0
    %298 = vmatmul.mubr.f32.gmra.mrb[0].mxu0 %v227
    %v299 = vpop.f32.mrb[0].mxu0
    %v300 = vadd.f32 %v223, %v299
    %v301 = vpop.f32.mrb[0].mxu0
    %302 = vdwg.mxu0
    %v303 = vxor.u32 %v300, 2147483648
    %v304 = vmul.f32 %v303, 1.442695
    %v305 = vpow.pop %v304
    %v306 = vadd.f32 %v305, 1.0
    %v307 = vrcp.pop %v306
    %v308 = vmul.f32 1.0, %v307
    %v309 = vlaneseq
    %v310 = vshrl.u32 %v309, 7
    %v311 = vsub.s32 0, %v310
    %v312 = vrot.slane %v308, %v311
    %314 = vbcast.lane.b32.xlu0 %v312, 256
    %v315 = vpop.permute.xlu0 %314
    %s317 = sor.u32 256, 8
    %318 = vbcast.lane.b32.xlu0 %v312, %s317
    %v319 = vpop.permute.xlu0 %318
    %s321 = sor.u32 256, 16
    %322 = vbcast.lane.b32.xlu0 %v312, %s321
    %v323 = vpop.permute.xlu0 %322
    %s325 = sor.u32 256, 24
    %326 = vbcast.lane.b32.xlu0 %v312, %s325
    %v327 = vpop.permute.xlu0 %326
    %v328 = vlaneseq
    %v329 = vshrl.u32 %v328, 7
    %v330 = vsub.s32 1, %v329
    %v331 = vrot.slane %v308, %v330
    %333 = vbcast.lane.b32.xlu0 %v331, 256
    %v334 = vpop.permute.xlu0 %333
    %s336 = sor.u32 256, 8
    %337 = vbcast.lane.b32.xlu0 %v331, %s336
    %v338 = vpop.permute.xlu0 %337
    %s340 = sor.u32 256, 16
    %341 = vbcast.lane.b32.xlu0 %v331, %s340
    %v342 = vpop.permute.xlu0 %341
    %s344 = sor.u32 256, 24
    %345 = vbcast.lane.b32.xlu0 %v331, %s344
    %v346 = vpop.permute.xlu0 %345
    %v347 = vmul.f32 %v35, %v315
    %v348 = vmul.f32 %v36, %v319
    %v349 = vmul.f32 %v37, %v323
    %v350 = vmul.f32 %v38, %v327
    %v351 = vmul.f32 %v39, %v334
    %v352 = vmul.f32 %v40, %v338
    %v353 = vmul.f32 %v41, %v342
    %v354 = vmul.f32 %v42, %v346
    %355 = vst.msk [vmem:[#allocation5] sm:$0xff] %vm43, %v347
    %356 = vst.msk [vmem:[#allocation5 + $0x8] sm:$0xff] %vm43, %v348
    %357 = vst.msk [vmem:[#allocation5 + $0x10] sm:$0xff] %vm43, %v349
    %358 = vst.msk [vmem:[#allocation5 + $0x18] sm:$0xff] %vm43, %v350
    %359 = vst.msk [vmem:[#allocation5 + $0x20] sm:$0xff] %vm43, %v351
    %360 = vst.msk [vmem:[#allocation5 + $0x28] sm:$0xff] %vm43, %v352
    %361 = vst.msk [vmem:[#allocation5 + $0x30] sm:$0xff] %vm43, %v353
    %362 = vst.msk [vmem:[#allocation5 + $0x38] sm:$0xff] %vm43, %v354
    // Predicated region
    $region26: #{tpu_custom_call.1} parent=1 // pred_check
      _
    $region27: #{tpu_custom_call.1} parent=1 // pred_check_branch
      %364 = sbr.rel (0) target = $region29
    $region28: #{tpu_custom_call.1} parent=1 // pred_region
      %s366 = ssub.s32 1024, 1024
      %367 = vsyncadd [#allocation4], %s366
      %s368 = sshll.u32 [#allocation5], 4
      %s369 = int_to_ptr.vmem [resolvable:$true] %s368
      %374 = dma.vmem_to_hbm [thread:$0]  %s369, 1024, %s5, [#allocation4], 128, 128, 8
    $region29: #{tpu_custom_call.1} parent=1 // pred_fallthru
      _
    // Predicated region
    $region30: #{tpu_custom_call.1} parent=1 // pred_check
      _
    $region31: #{tpu_custom_call.1} parent=1 // pred_check_branch
      %376 = sbr.rel (0) target = $region33
    $region32: #{tpu_custom_call.1} parent=1 // pred_region
      %377 = dma.done [#allocation4], 1024
    $region33: #{tpu_custom_call.1} parent=1 // pred_fallthru
      _
    %378 = vsyncpa [#allocation3], 1
    %379 = vsyncpa [#allocation4], 1

</llo_original>
